<compile_context>
chip_gen: v5e
topology: v5e:2x2
jax: 0.10.0
libtpu: 0.0.40
codegen_flags: <defaults>
</compile_context>

<pallas_src>
import jax
import jax.numpy as jnp
from jax.experimental import pallas as pl
from jax.experimental.pallas import tpu as pltpu

NEG_INF = -1e30
NUM_CLASSES = (10, 6, 2)   # cls1, cls2, cls3
CMAX = 10                  # per-head class padding (column = head * CMAX + class)
PADC = 128                 # lane-dense padded total column count (>= 3 * CMAX)


# ----------------------------------------------------------------------------
# Fused kernel: pooled backbone feature -> heads -> masked CE loss + argmax
# ----------------------------------------------------------------------------
def vit_fused_kernel(ds_ref, lbl_ref, p_ref, wf_ref, bf_ref, pred_ref, loss_ref):
    # ds_ref:   (B,)        i32   SMEM (scalar prefetch) - head id per sample
    # lbl_ref:  (B,)        i32   SMEM (scalar prefetch) - label per sample
    # p_ref:    (B, N, K)   bf16  patches
    # wf_ref:   (K, PADC)   bf16  fused weight  (w_patch @ w_heads_pad)
    # bf_ref:   (1, PADC)   f32   fused bias    (b_patch @ w_heads_pad + b_heads_pad)
    # pred_ref: (B, 1)      i32   argmax within the selected head
    # loss_ref: (1, 1)      f32   summed cross-entropy over the batch
    B = p_ref.shape[0]

    # Backbone stand-in: token mean (f32), hoisted in front of the fused linear.
    pmean = jnp.mean(p_ref[...].astype(jnp.float32), axis=1)              # (B, K)

    # Single fused, lane-dense MXU op: (B, K) @ (K, PADC), f32 accumulation.
    logits = jnp.dot(pmean.astype(jnp.bfloat16), wf_ref[...],
                     preferred_element_type=jnp.float32) + bf_ref[...]    # (B, PADC)

    # Per-sample head-id / label scalars (SMEM) -> (B, 1) vectors via selects.
    row = jax.lax.broadcasted_iota(jnp.int32, (B, 1), 0)
    ds_vec = jnp.zeros((B, 1), jnp.int32)
    lbl_vec = jnp.zeros((B, 1), jnp.int32)
    for i in range(B):                       # trace-time unrolled, B is static
        ds_vec = jnp.where(row == i, ds_ref[i], ds_vec)
        lbl_vec = jnp.where(row == i, lbl_ref[i], lbl_vec)

    # Per-column head / class ids from an iota: VPU compares only (no div/mod).
    col = jax.lax.broadcasted_iota(jnp.int32, (1, PADC), 1)
    head = jnp.where(col < CMAX, 0,
           jnp.where(col < 2 * CMAX, 1,
           jnp.where(col < 3 * CMAX, 2, 3)))
    cls = col - head * CMAX
    n_cls = jnp.where(head == 0, NUM_CLASSES[0],
            jnp.where(head == 1, NUM_CLASSES[1],
            jnp.where(head == 2, NUM_CLASSES[2], 0)))
    valid = (head == ds_vec) & (cls < n_cls)                              # (B, PADC)
    onehot = col == (ds_vec * CMAX + lbl_vec)                             # (B, PADC)

    masked = jnp.where(valid, logits, NEG_INF)

    # Softmax cross-entropy over the selected head's classes, summed over B
    # (matches `loss += CrossEntropyLoss(out, y)` with per-call batch of 1).
    m = jnp.max(masked, axis=-1, keepdims=True)                           # (B, 1)
    s = jnp.sum(jnp.exp(masked - m), axis=-1, keepdims=True)              # (B, 1)
    lse = m + jnp.log(s)                                                  # (B, 1)
    picked = jnp.sum(jnp.where(onehot, masked, 0.0), axis=-1, keepdims=True)
    loss_ref[...] = jnp.sum(lse - picked, axis=0, keepdims=True)          # (1, 1)

    # argmax within the selected head (first max on ties, like torch.max).
    is_max = masked >= m
    pred_ref[...] = jnp.min(jnp.where(is_max, cls, CMAX),
                            axis=-1, keepdims=True).astype(jnp.int32)     # (B, 1)


# ----------------------------------------------------------------------------
# Full forward (layout glue + one pallas_call)
# ----------------------------------------------------------------------------
def vit_model_forward(params, x, ds, label, patch):
    B, C, H, W = x.shape
    Hp, Wp = H // patch, W // patch
    K = C * patch * patch
    N = Hp * Wp

    # NCHW -> non-overlapping patches [B, N, C*P*P], done in bf16 so the
    # transpose traffic and the kernel's patch DMA are halved.
    xb = x.astype(jnp.bfloat16)
    patches = xb.reshape(B, C, Hp, patch, Wp, patch)
    patches = patches.transpose(0, 2, 4, 1, 3, 5).reshape(B, N, K)

    grid_spec = pltpu.PrefetchScalarGridSpec(
        num_scalar_prefetch=2,           # ds, label -> SMEM
        grid=(1,),                       # whole (tiny) batch in one step;
                                         # batch-tile + "parallel" when B grows (v7x 2 TCs)
        in_specs=[
            pl.BlockSpec(memory_space=pltpu.MemorySpace.VMEM),  # patches
            pl.BlockSpec(memory_space=pltpu.MemorySpace.VMEM),  # fused weight
            pl.BlockSpec(memory_space=pltpu.MemorySpace.VMEM),  # fused bias
        ],
        out_specs=[
            pl.BlockSpec(memory_space=pltpu.MemorySpace.VMEM),  # pred
            pl.BlockSpec(memory_space=pltpu.MemorySpace.VMEM),  # loss
        ],
    )

    pred, loss = pl.pallas_call(
        vit_fused_kernel,
        out_shape=(
            jax.ShapeDtypeStruct((B, 1), jnp.int32),
            jax.ShapeDtypeStruct((1, 1), jnp.float32),
        ),
        grid_spec=grid_spec,
        compiler_params=pltpu.CompilerParams(
            dimension_semantics=("arbitrary",),
            vmem_limit_bytes=32 * 1024 * 1024,   # safe on v5e/v6e/v7x; working set << 1 MiB
        ),
    )(ds.astype(jnp.int32), label.astype(jnp.int32),
      patches, params["w_fused"], params["b_fused"])

    return pred.reshape(B), loss.reshape(())


# ----------------------------------------------------------------------------
# Pure-JAX reference for validation (mirrors the PyTorch module semantics, f32)
# ----------------------------------------------------------------------------
def reference_forward(params, x, ds, label, patch):
    B, C, H, W = x.shape
    Hp, Wp = H // patch, W // patch
    K = C * patch * patch
    patches = x.reshape(B, C, Hp, patch, Wp, patch)
    patches = patches.transpose(0, 2, 4, 1, 3, 5).reshape(B, Hp * Wp, K)
    patches = patches.astype(jnp.float32)
    toks = jnp.einsum("bnk,kd->bnd", patches, params["w_patch"]) + params["b_patch"]
    feature = jnp.mean(toks, axis=1)                                      # (B, dim)

    w_heads = params["w_heads"]   # (3, dim, CMAX)
    b_heads = params["b_heads"]   # (3, CMAX)
    preds, loss = [], 0.0
    for i in range(B):
        d = int(ds[i]); nc = NUM_CLASSES[d]
        out = feature[i] @ w_heads[d][:, :nc] + b_heads[d][:nc]
        preds.append(int(jnp.argmax(out)))
        logz = jax.scipy.special.logsumexp(out)
        loss = loss + (logz - out[int(label[i])])
    return jnp.array(preds, jnp.int32), jnp.asarray(loss, jnp.float32)


if __name__ == "__main__":
    # Small deterministic setup consistent with the module's forward.
    B, C, H, W = 2, 4, 16, 16
    patch = 4
    dim = 32
    K = C * patch * patch

    key = jax.random.PRNGKey(0)
    kx, kwp, kbp, kwh, kbh = jax.random.split(key, 5)

    x = jax.random.normal(kx, (B, C, H, W), jnp.float32)
    ds = jnp.array([1, 2], jnp.int32)      # which classifier head per sample
    label = jnp.array([4, 1], jnp.int32)   # valid for heads with 6 and 2 classes

    # Guard against out-of-range labels (the kernel would silently read a
    # -1e30 masked column and the loss would explode).
    nc_per_head = jnp.array(NUM_CLASSES, jnp.int32)
    assert bool(jnp.all(label < nc_per_head[ds])), "label out of range for its head"

    w_patch = 0.02 * jax.random.normal(kwp, (K, dim), jnp.float32)
    b_patch = 0.01 * jax.random.normal(kbp, (1, dim), jnp.float32)
    w_heads = 0.02 * jax.random.normal(kwh, (3, dim, CMAX), jnp.float32)
    b_heads = 0.01 * jax.random.normal(kbh, (3, CMAX), jnp.float32)

    # Flattened heads (column = head * CMAX + class), zero-padded to 128 lanes.
    w_heads_flat = jnp.transpose(w_heads, (1, 0, 2)).reshape(dim, 3 * CMAX)
    b_heads_flat = b_heads.reshape(1, 3 * CMAX)
    w_heads_pad = jnp.zeros((dim, PADC), jnp.float32).at[:, :3 * CMAX].set(w_heads_flat)
    b_heads_pad = jnp.zeros((1, PADC), jnp.float32).at[:, :3 * CMAX].set(b_heads_flat)

    # Fold the (linear) backbone patch-embedding into the heads weight ONCE:
    # mean_n(P) @ Wp @ Wh + (bp @ Wh + bh)  ==  (mean_n(P) @ Wp + bp) @ Wh + bh.
    w_fused = (w_patch @ w_heads_pad).astype(jnp.bfloat16)   # (K, PADC) bf16
    b_fused = b_patch @ w_heads_pad + b_heads_pad            # (1, PADC) f32

    params = {
        "w_patch": w_patch, "b_patch": b_patch,
        "w_heads": w_heads, "b_heads": b_heads,
        "w_fused": w_fused, "b_fused": b_fused,
    }

    forward = jax.jit(vit_model_forward, static_argnums=4)
    pred, loss = forward(params, x, ds, label, patch)
    pred = jax.block_until_ready(pred)
    loss = jax.block_until_ready(loss)

    ref_pred, ref_loss = reference_forward(params, x, ds, label, patch)
    assert bool(jnp.all(pred == ref_pred)), (pred, ref_pred)
    # bf16 matmul inputs + matmul fold change rounding vs the f32 reference.
    assert bool(jnp.allclose(loss, ref_loss, rtol=1e-2, atol=1e-2)), (loss, ref_loss)

    print("KERNEL_OK")
</pallas_src>

<mosaic_0001>
module attributes {stable_mosaic.version = 11 : i64} {
  func.func @vit_fused_kernel(%arg0: i32, %arg1: memref<2xi32, #tpu.memory_space<smem>>, %arg2: memref<2xi32, #tpu.memory_space<smem>>, %arg3: memref<2x16x64xbf16, #tpu.memory_space<vmem>>, %arg4: memref<64x128xbf16, #tpu.memory_space<vmem>>, %arg5: memref<1x128xf32, #tpu.memory_space<vmem>>, %arg6: memref<2x1xi32, #tpu.memory_space<vmem>>, %arg7: memref<1x1xf32, #tpu.memory_space<vmem>>) attributes {dimension_semantics = [#tpu.dimension_semantics<arbitrary>], iteration_bounds = array<i64: 1>, scalar_prefetch = 2 : i64, scratch_operands = 0 : i64, tpu.core_type = #tpu.core_type<tc>, window_params = [{pipeline_mode = #tpu.pipeline_mode<synchronous>, transform_indices = @transform_0, window_bounds = array<i64: 2, 16, 64>}, {pipeline_mode = #tpu.pipeline_mode<synchronous>, transform_indices = @transform_1, window_bounds = array<i64: 64, 128>}, {pipeline_mode = #tpu.pipeline_mode<synchronous>, transform_indices = @transform_2, window_bounds = array<i64: 1, 128>}, {pipeline_mode = #tpu.pipeline_mode<synchronous>, transform_indices = @transform_3, window_bounds = array<i64: 2, 1>}, {pipeline_mode = #tpu.pipeline_mode<synchronous>, transform_indices = @transform_4, window_bounds = array<i64: 1, 1>}]} {
    %c0 = arith.constant 0 : index
    %c0_0 = arith.constant 0 : index
    %c0_1 = arith.constant 0 : index
    %0 = vector.load %arg3[%c0, %c0_0, %c0_1] : memref<2x16x64xbf16, #tpu.memory_space<vmem>>, vector<2x16x64xbf16>
    %1 = arith.extf %0 : vector<2x16x64xbf16> to vector<2x16x64xf32>
    %cst = arith.constant dense<0.000000e+00> : vector<2x64xf32>
    %2 = vector.multi_reduction <add>, %1, %cst [1] : vector<2x16x64xf32> to vector<2x64xf32>
    %cst_2 = arith.constant 1.600000e+01 : f32
    %3 = vector.broadcast %cst_2 : f32 to vector<2x64xf32>
    %4 = arith.divf %2, %3 : vector<2x64xf32>
    %5 = arith.truncf %4 : vector<2x64xf32> to vector<2x64xbf16>
    %c0_3 = arith.constant 0 : index
    %c0_4 = arith.constant 0 : index
    %6 = vector.load %arg4[%c0_3, %c0_4] : memref<64x128xbf16, #tpu.memory_space<vmem>>, vector<64x128xbf16>
    %cst_5 = arith.constant dense<0.000000e+00> : vector<2x128xf32>
    %7 = tpu.matmul %5, %6, %cst_5 {dimension_numbers = #tpu.dot_dimension_numbers<[1], [0], [0], [1], [0, 0, 1, 1], [], []>} : vector<2x64xbf16>, vector<64x128xbf16>, vector<2x128xf32> -> vector<2x128xf32>
    %c0_6 = arith.constant 0 : index
    %c0_7 = arith.constant 0 : index
    %8 = vector.load %arg5[%c0_6, %c0_7] : memref<1x128xf32, #tpu.memory_space<vmem>>, vector<1x128xf32>
    %9 = vector.broadcast %8 : vector<1x128xf32> to vector<2x128xf32>
    %10 = arith.addf %7, %9 : vector<2x128xf32>
    %11 = tpu.iota {dimensions = array<i32: 0>} : vector<2x1xi32>
    %c0_i32 = arith.constant 0 : i32
    %12 = vector.broadcast %c0_i32 : i32 to vector<2x1xi32>
    %c0_i32_8 = arith.constant 0 : i32
    %13 = vector.broadcast %c0_i32_8 : i32 to vector<2x1xi32>
    %c0_i32_9 = arith.constant 0 : i32
    %14 = vector.broadcast %c0_i32_9 : i32 to vector<2x1xi32>
    %15 = arith.cmpi eq, %11, %14 : vector<2x1xi32>
    %c0_10 = arith.constant 0 : index
    %16 = memref.load %arg1[%c0_10] : memref<2xi32, #tpu.memory_space<smem>>
    %17 = vector.broadcast %16 : i32 to vector<2x1xi32>
    %18 = arith.select %15, %17, %12 : vector<2x1xi1>, vector<2x1xi32>
    %c0_i32_11 = arith.constant 0 : i32
    %19 = vector.broadcast %c0_i32_11 : i32 to vector<2x1xi32>
    %20 = arith.cmpi eq, %11, %19 : vector<2x1xi32>
    %c0_12 = arith.constant 0 : index
    %21 = memref.load %arg2[%c0_12] : memref<2xi32, #tpu.memory_space<smem>>
    %22 = vector.broadcast %21 : i32 to vector<2x1xi32>
    %23 = arith.select %20, %22, %13 : vector<2x1xi1>, vector<2x1xi32>
    %c1_i32 = arith.constant 1 : i32
    %24 = vector.broadcast %c1_i32 : i32 to vector<2x1xi32>
    %25 = arith.cmpi eq, %11, %24 : vector<2x1xi32>
    %c1 = arith.constant 1 : index
    %26 = memref.load %arg1[%c1] : memref<2xi32, #tpu.memory_space<smem>>
    %27 = vector.broadcast %26 : i32 to vector<2x1xi32>
    %28 = arith.select %25, %27, %18 : vector<2x1xi1>, vector<2x1xi32>
    %c1_i32_13 = arith.constant 1 : i32
    %29 = vector.broadcast %c1_i32_13 : i32 to vector<2x1xi32>
    %30 = arith.cmpi eq, %11, %29 : vector<2x1xi32>
    %c1_14 = arith.constant 1 : index
    %31 = memref.load %arg2[%c1_14] : memref<2xi32, #tpu.memory_space<smem>>
    %32 = vector.broadcast %31 : i32 to vector<2x1xi32>
    %33 = arith.select %30, %32, %23 : vector<2x1xi1>, vector<2x1xi32>
    %34 = tpu.iota {dimensions = array<i32: 1>} : vector<1x128xi32>
    %c10_i32 = arith.constant 10 : i32
    %35 = vector.broadcast %c10_i32 : i32 to vector<1x128xi32>
    %36 = arith.cmpi slt, %34, %35 : vector<1x128xi32>
    %c20_i32 = arith.constant 20 : i32
    %37 = vector.broadcast %c20_i32 : i32 to vector<1x128xi32>
    %38 = arith.cmpi slt, %34, %37 : vector<1x128xi32>
    %c30_i32 = arith.constant 30 : i32
    %39 = vector.broadcast %c30_i32 : i32 to vector<1x128xi32>
    %40 = arith.cmpi slt, %34, %39 : vector<1x128xi32>
    %c2_i32 = arith.constant 2 : i32
    %c3_i32 = arith.constant 3 : i32
    %41 = vector.broadcast %c2_i32 : i32 to vector<1x128xi32>
    %42 = vector.broadcast %c3_i32 : i32 to vector<1x128xi32>
    %43 = arith.select %40, %41, %42 : vector<1x128xi1>, vector<1x128xi32>
    %c1_i32_15 = arith.constant 1 : i32
    %44 = vector.broadcast %c1_i32_15 : i32 to vector<1x128xi32>
    %45 = arith.select %38, %44, %43 : vector<1x128xi1>, vector<1x128xi32>
    %c0_i32_16 = arith.constant 0 : i32
    %46 = vector.broadcast %c0_i32_16 : i32 to vector<1x128xi32>
    %47 = arith.select %36, %46, %45 : vector<1x128xi1>, vector<1x128xi32>
    %c10_i32_17 = arith.constant 10 : i32
    %48 = vector.broadcast %c10_i32_17 : i32 to vector<1x128xi32>
    %49 = arith.muli %47, %48 : vector<1x128xi32>
    %50 = arith.subi %34, %49 : vector<1x128xi32>
    %c0_i32_18 = arith.constant 0 : i32
    %51 = vector.broadcast %c0_i32_18 : i32 to vector<1x128xi32>
    %52 = arith.cmpi eq, %47, %51 : vector<1x128xi32>
    %c1_i32_19 = arith.constant 1 : i32
    %53 = vector.broadcast %c1_i32_19 : i32 to vector<1x128xi32>
    %54 = arith.cmpi eq, %47, %53 : vector<1x128xi32>
    %c2_i32_20 = arith.constant 2 : i32
    %55 = vector.broadcast %c2_i32_20 : i32 to vector<1x128xi32>
    %56 = arith.cmpi eq, %47, %55 : vector<1x128xi32>
    %c2_i32_21 = arith.constant 2 : i32
    %c0_i32_22 = arith.constant 0 : i32
    %57 = vector.broadcast %c2_i32_21 : i32 to vector<1x128xi32>
    %58 = vector.broadcast %c0_i32_22 : i32 to vector<1x128xi32>
    %59 = arith.select %56, %57, %58 : vector<1x128xi1>, vector<1x128xi32>
    %c6_i32 = arith.constant 6 : i32
    %60 = vector.broadcast %c6_i32 : i32 to vector<1x128xi32>
    %61 = arith.select %54, %60, %59 : vector<1x128xi1>, vector<1x128xi32>
    %c10_i32_23 = arith.constant 10 : i32
    %62 = vector.broadcast %c10_i32_23 : i32 to vector<1x128xi32>
    %63 = arith.select %52, %62, %61 : vector<1x128xi1>, vector<1x128xi32>
    %64 = vector.broadcast %47 : vector<1x128xi32> to vector<2x128xi32>
    %65 = vector.broadcast %28 : vector<2x1xi32> to vector<2x128xi32>
    %66 = arith.cmpi eq, %64, %65 : vector<2x128xi32>
    %67 = arith.cmpi slt, %50, %63 : vector<1x128xi32>
    %68 = vector.broadcast %67 : vector<1x128xi1> to vector<2x128xi1>
    %69 = arith.andi %66, %68 : vector<2x128xi1>
    %c10_i32_24 = arith.constant 10 : i32
    %70 = vector.broadcast %c10_i32_24 : i32 to vector<2x1xi32>
    %71 = arith.muli %28, %70 : vector<2x1xi32>
    %72 = arith.addi %71, %33 : vector<2x1xi32>
    %73 = vector.broadcast %34 : vector<1x128xi32> to vector<2x128xi32>
    %74 = vector.broadcast %72 : vector<2x1xi32> to vector<2x128xi32>
    %75 = arith.cmpi eq, %73, %74 : vector<2x128xi32>
    %cst_25 = arith.constant -1.000000e+30 : f32
    %76 = vector.broadcast %cst_25 : f32 to vector<2x128xf32>
    %77 = arith.select %69, %10, %76 : vector<2x128xi1>, vector<2x128xf32>
    %cst_26 = arith.constant dense<0xFF800000> : vector<2xf32>
    %78 = vector.multi_reduction <maximumf>, %77, %cst_26 [1] : vector<2x128xf32> to vector<2xf32>
    %79 = vector.shape_cast %78 : vector<2xf32> to vector<2x1xf32>
    %80 = vector.broadcast %79 : vector<2x1xf32> to vector<2x128xf32>
    %81 = arith.subf %77, %80 : vector<2x128xf32>
    %82 = math.exp %81 : vector<2x128xf32>
    %cst_27 = arith.constant dense<0.000000e+00> : vector<2xf32>
    %83 = vector.multi_reduction <add>, %82, %cst_27 [1] : vector<2x128xf32> to vector<2xf32>
    %84 = vector.shape_cast %83 : vector<2xf32> to vector<2x1xf32>
    %85 = math.log %84 : vector<2x1xf32>
    %86 = arith.addf %79, %85 : vector<2x1xf32>
    %cst_28 = arith.constant 0.000000e+00 : f32
    %87 = vector.broadcast %cst_28 : f32 to vector<2x128xf32>
    %88 = arith.select %75, %77, %87 : vector<2x128xi1>, vector<2x128xf32>
    %cst_29 = arith.constant dense<0.000000e+00> : vector<2xf32>
    %89 = vector.multi_reduction <add>, %88, %cst_29 [1] : vector<2x128xf32> to vector<2xf32>
    %90 = vector.shape_cast %89 : vector<2xf32> to vector<2x1xf32>
    %91 = arith.subf %86, %90 : vector<2x1xf32>
    %cst_30 = arith.constant dense<0.000000e+00> : vector<1xf32>
    %92 = vector.multi_reduction <add>, %91, %cst_30 [0] : vector<2x1xf32> to vector<1xf32>
    %93 = vector.shape_cast %92 : vector<1xf32> to vector<1x1xf32>
    %c0_31 = arith.constant 0 : index
    %c0_32 = arith.constant 0 : index
    %94 = vector.load %arg7[%c0_31, %c0_32] : memref<1x1xf32, #tpu.memory_space<vmem>>, vector<1x1xf32>
    tpu.vector_store %arg7[%c0_31, %c0_32], %93 {strides = array<i32>} : memref<1x1xf32, #tpu.memory_space<vmem>>, vector<1x1xf32>,
    %95 = vector.broadcast %79 : vector<2x1xf32> to vector<2x128xf32>
    %96 = arith.cmpf oge, %77, %95 : vector<2x128xf32>
    %c10_i32_33 = arith.constant 10 : i32
    %97 = vector.shape_cast %50 : vector<1x128xi32> to vector<1x128xi32>
    %98 = vector.broadcast %97 : vector<1x128xi32> to vector<2x128xi32>
    %99 = vector.broadcast %c10_i32_33 : i32 to vector<2x128xi32>
    %100 = arith.select %96, %98, %99 : vector<2x128xi1>, vector<2x128xi32>
    %cst_34 = arith.constant dense<2147483647> : vector<2xi32>
    %101 = vector.multi_reduction <minsi>, %100, %cst_34 [1] : vector<2x128xi32> to vector<2xi32>
    %102 = vector.shape_cast %101 : vector<2xi32> to vector<2x1xi32>
    %c0_35 = arith.constant 0 : index
    %c0_36 = arith.constant 0 : index
    %103 = vector.load %arg6[%c0_35, %c0_36] : memref<2x1xi32, #tpu.memory_space<vmem>>, vector<2x1xi32>
    tpu.vector_store %arg6[%c0_35, %c0_36], %102 {strides = array<i32>} : memref<2x1xi32, #tpu.memory_space<vmem>>, vector<2x1xi32>,
    return
  }
  func.func @transform_0(%arg0: i32, %arg1: memref<2xi32, #tpu.memory_space<smem>>, %arg2: memref<2xi32, #tpu.memory_space<smem>>) -> (i32, i32, i32) {
    %c0_i32 = arith.constant 0 : i32
    %c0_i32_0 = arith.constant 0 : i32
    %c0_i32_1 = arith.constant 0 : i32
    %c0_i32_2 = arith.constant 0 : i32
    return %c0_i32, %c0_i32_0, %c0_i32_1 : i32, i32, i32
  }
  func.func @transform_1(%arg0: i32, %arg1: memref<2xi32, #tpu.memory_space<smem>>, %arg2: memref<2xi32, #tpu.memory_space<smem>>) -> (i32, i32) {
    %c0_i32 = arith.constant 0 : i32
    %c0_i32_0 = arith.constant 0 : i32
    %c0_i32_1 = arith.constant 0 : i32
    return %c0_i32, %c0_i32_0 : i32, i32
  }
  func.func @transform_2(%arg0: i32, %arg1: memref<2xi32, #tpu.memory_space<smem>>, %arg2: memref<2xi32, #tpu.memory_space<smem>>) -> (i32, i32) {
    %c0_i32 = arith.constant 0 : i32
    %c0_i32_0 = arith.constant 0 : i32
    %c0_i32_1 = arith.constant 0 : i32
    return %c0_i32, %c0_i32_0 : i32, i32
  }
  func.func @transform_3(%arg0: i32, %arg1: memref<2xi32, #tpu.memory_space<smem>>, %arg2: memref<2xi32, #tpu.memory_space<smem>>) -> (i32, i32) {
    %c0_i32 = arith.constant 0 : i32
    %c0_i32_0 = arith.constant 0 : i32
    %c0_i32_1 = arith.constant 0 : i32
    return %c0_i32, %c0_i32_0 : i32, i32
  }
  func.func @transform_4(%arg0: i32, %arg1: memref<2xi32, #tpu.memory_space<smem>>, %arg2: memref<2xi32, #tpu.memory_space<smem>>) -> (i32, i32) {
    %c0_i32 = arith.constant 0 : i32
    %c0_i32_0 = arith.constant 0 : i32
    %c0_i32_1 = arith.constant 0 : i32
    return %c0_i32, %c0_i32_0 : i32, i32
  }
}

</mosaic_0001>

<llo_original>
// kernel: vit_model_forward.1
$region0: #{vit_model_forward.1}
  #allocation0 [shape = 'u32[]', space=smem, size = 0x4, offset = 0x4, fixed_abs, tag = 'smem constant byte address 0x4 - core index']
  #allocation1 [shape = 'u32[72,128]{1,0:T(1,128)}', space=vmem, size = 0x9000, scoped, tag = 'internal scratch']
  #allocation2 [shape = 's32[1]{0}', space=sflag, size = 0x4, scoped, tag = 'scoped memory for vit_model_forward.1']
  #allocation3 [shape = 'u8[512]{0}', space=smem, size = 0x200, scoped, tag = 'prefetched SMEM operand 0']
  #allocation4 [shape = 'u8[512]{0}', space=smem, size = 0x200, scoped, tag = 'prefetched SMEM operand 1']
  %s0 = inlined_call_operand.vmem [shape: s32[2], index: 0, kind: input, shape index: {}]
  %s1 = inlined_call_operand.vmem [shape: s32[2], index: 1, kind: input, shape index: {}]
  %s2 = inlined_call_operand.vmem [shape: bf16[2,16,64], index: 2, kind: input, shape index: {}]
  %s3 = inlined_call_operand.vmem [shape: bf16[64,128], index: 3, kind: input, shape index: {}]
  %s4 = inlined_call_operand.vmem [shape: f32[1,128], index: 4, kind: input, shape index: {}]
  %s5 = inlined_call_operand.vmem [shape: s32[2,1], index: 5, kind: output, shape index: {0}]
  %s6 = inlined_call_operand.hbm [shape: f32[1,1], index: 6, kind: output, shape index: {1}]
  %7 = xla_tuple %s5, %s6
  %s8 = sld [smem:[#allocation0]]
  $region30: #{vit_model_forward.1} parent=0
    _
  %s10 = ssub.s32 1, %s8
  %s11 = scalar_select 0, %s10, %s8
  %s13 = sshll.u32 %s0, 4
  %s14 = int_to_ptr.vmem [resolvable:$true] %s13
  %16 = dma.vmem_to_smem %s14, 16, [#allocation3], [#allocation2]
  %s18 = sshll.u32 %s1, 4
  %s19 = int_to_ptr.vmem [resolvable:$true] %s18
  %21 = dma.vmem_to_smem %s19, 16, [#allocation4], [#allocation2]
  %23 = dma.done [#allocation2], 32
  %24 = sfence
  $region1: #{vit_model_forward.1} parent=0
    #allocation5 [shape = 'u8[512]{0}', space=vmem, size = 0x400, scoped, tag = 'output window, operand 1, single buffered']
    #allocation6 [shape = 's32[1]{0}', space=sflag, size = 0x4, scoped, tag = 'scoped memory for vit_model_forward.1']
    %25 = vsyncpa [#allocation6], 0
    // Predicated region
    $region2: #{vit_model_forward.1} parent=1 // pred_check
      _
    $region3: #{vit_model_forward.1} parent=1 // pred_check_branch
      %27 = sbr.rel (0) target = $region5
    $region4: #{vit_model_forward.1} parent=1 // pred_region
      _
    $region5: #{vit_model_forward.1} parent=1 // pred_fallthru
      _
    // Predicated region
    $region6: #{vit_model_forward.1} parent=1 // pred_check
      _
    $region7: #{vit_model_forward.1} parent=1 // pred_check_branch
      %29 = sbr.rel (0) target = $region9
    $region8: #{vit_model_forward.1} parent=1 // pred_region
      _
    $region9: #{vit_model_forward.1} parent=1 // pred_fallthru
      _
    // Predicated region
    $region10: #{vit_model_forward.1} parent=1 // pred_check
      _
    $region11: #{vit_model_forward.1} parent=1 // pred_check_branch
      %31 = sbr.rel (0) target = $region13
    $region12: #{vit_model_forward.1} parent=1 // pred_region
      _
    $region13: #{vit_model_forward.1} parent=1 // pred_fallthru
      _
    %v33 = vld [vmem:[%s2] sm:$0xf]
    %v34 = vld [vmem:[%s2 + $0x4] sm:$0xf]
    %v35 = vld [vmem:[%s2 + $0x8] sm:$0xf]
    %v36 = vld [vmem:[%s2 + $0xc] sm:$0xf]
    %v37 = vunpack.c.l.bf16 %v33
    %v38 = vunpack.c.l.bf16 %v34
    %v39 = vunpack.c.l.bf16 %v35
    %v40 = vunpack.c.l.bf16 %v36
    %vm41 = vcmask 523264
    %v42 = vsel %vm41, %v37, 0.0
    %v43 = vsel %vm41, %v38, 0.0
    %v44 = vadd.f32 %v42, %v43
    %v45 = vrot.slane %v44, 4
    %v46 = vadd.f32 %v44, %v45
    %v47 = vrot.slane %v46, 2
    %v48 = vadd.f32 %v46, %v47
    %v49 = vrot.slane %v48, 1
    %v50 = vadd.f32 %v48, %v49
    %v51 = vsel %vm41, %v39, 0.0
    %v52 = vsel %vm41, %v40, 0.0
    %v53 = vadd.f32 %v51, %v52
    %v54 = vrot.slane %v53, 4
    %v55 = vadd.f32 %v53, %v54
    %v56 = vrot.slane %v55, 2
    %v57 = vadd.f32 %v55, %v56
    %v58 = vrot.slane %v57, 1
    %v59 = vadd.f32 %v57, %v58
    %v60 = vrcp.pop 16.0
    %v61 = vmul.f32 16.0, %v60
    %v62 = vsub.f32 1.0, %v61
    %v63 = vmul.f32 %v60, %v62
    %v64 = vadd.f32 %v60, %v63
    %vm65 = vweird.f32 %v60
    %v66 = vsel %vm65, %v60, %v64
    %v67 = vmul.f32 %v50, %v66
    %v68 = vmul.f32 %v59, %v66
    %v69 = vpack.c.bf16 %v67, %v67
    %v70 = vpack.c.bf16 %v68, %v68
    %v71 = vld [vmem:[%s3] sm:$0xf]
    %v72 = vld [vmem:[%s3 + $0x4] sm:$0xf]
    %v73 = vld [vmem:[%s3 + $0x8] sm:$0xf]
    %v74 = vld [vmem:[%s3 + $0xc] sm:$0xf]
    %v75 = vld [vmem:[%s3 + $0x10] sm:$0xf]
    %v76 = vld [vmem:[%s3 + $0x14] sm:$0xf]
    %v77 = vld [vmem:[%s3 + $0x18] sm:$0xf]
    %v78 = vld [vmem:[%s3 + $0x1c] sm:$0xf]
    %v79 = vld [vmem:[%s4] sm:$0x1]
    %v81 = vperm.slane %v79, 0
    %v85 = vunpack.c.l.b16 %v69
    %v86 = vunpack.c.l.b16 %v70
    %vm87 = vcmask 1041409
    %v88 = vsel %vm87, %v86, %v85
    %v89 = vpack.c.b16 %v88, %v88
    %v98 = vunpack.c.l.b16 %v71
    %v99 = vunpack.c.l.b16 %v72
    %v100 = vunpack.c.l.b16 %v73
    %v101 = vunpack.c.l.b16 %v74
    %v102 = vunpack.c.l.b16 %v75
    %v103 = vunpack.c.l.b16 %v76
    %v104 = vunpack.c.l.b16 %v77
    %v105 = vunpack.c.l.b16 %v78
    %v106 = vpack.c.b16 %v99, %v98
    %v107 = vpack.c.b16 %v101, %v100
    %v108 = vpack.c.b16 %v103, %v102
    %v109 = vpack.c.b16 %v105, %v104
    %v115 = vsel %vm41, %v89, 0
    %117 = vmatpush.bf16.msra.mxu0 0
    %118 = vmatpush.bf16.msra.mxu0 0
    %119 = vmatpush.bf16.msra.mxu0 0
    %120 = vmatpush.bf16.msra.mxu0 0
    %121 = vmatpush.bf16.msra.mxu0 %v109
    %122 = vmatpush.bf16.msra.mxu0 %v108
    %123 = vmatpush.bf16.msra.mxu0 %v107
    %124 = vmatpush.bf16.msra.mxu0 %v106
    %125 = vmatmul.bf16.gmra.mxu0 %v115
    %v126 = vpop.f32.mrf.mxu0
    %v127 = vadd.f32 %v81, %v126
    %v128 = vpop.f32.mrf.mxu0
    %129 = vdwg.mxu0
    %v130 = vlaneseq
    %v131 = vshrl.u32 %v130, 7
    %vm132 = vcmp.eq.s32.totalorder %v131, 0
    %s133 = sld [smem:[#allocation3]]
    %v134 = vstv %s133
    %v135 = vsel %vm132, %v134, 0
    %s136 = sld [smem:[#allocation4]]
    %v137 = vstv %s136
    %v138 = vsel %vm132, %v137, 0
    %vm139 = vcmp.eq.s32.totalorder %v131, 1
    %s140 = sld [smem:[#allocation3 + $0x1]]
    %v141 = vstv %s140
    %v142 = vsel %vm139, %v141, %v135
    %s143 = sld [smem:[#allocation4 + $0x1]]
    %v144 = vstv %s143
    %v145 = vsel %vm139, %v144, %v138
    %v146 = vlaneseq
    %v147 = vand.u32 %v146, 127
    %vm148 = vcmp.lt.s32.totalorder %v147, 10
    %vm149 = vcmp.lt.s32.totalorder %v147, 20
    %vm150 = vcmp.lt.s32.totalorder %v147, 30
    %v151 = vsel %vm150, 2, 3
    %v152 = vsel %vm149, 1, %v151
    %v153 = vsel %vm148, 0, %v152
    %v154 = vmul.u32 %v153, 10
    %v155 = vsub.s32 %v147, %v154
    %vm156 = vcmp.eq.s32.totalorder %v153, 0
    %vm157 = vcmp.eq.s32.totalorder %v153, 1
    %vm158 = vcmp.eq.s32.totalorder %v153, 2
    %v159 = vsel %vm158, 2, 0
    %v160 = vsel %vm157, 6, %v159
    %v161 = vsel %vm156, 10, %v160
    %vm162 = vcmp.eq.s32.totalorder %v153, %v142
    %vm163 = vcmp.lt.s32.totalorder %v155, %v161
    %v164 = vsel %vm163, 1, 0
    %vm165 = vcmp.eq.s32.totalorder %v164, 1
    %vm166 = vmand %vm162, %vm165
    %v167 = vmul.u32 %v142, 10
    %v168 = vadd.s32 %v167, %v145
    %vm169 = vcmp.eq.s32.totalorder %v147, %v168
    %v170 = vsel %vm166, %v127, -1e+30
    %vm171 = vcmask 1041408
    %v172 = vsel %vm171, %v170, -inf
    %173 = vmax.xlane.f32.xlu0 %v172
    %v174 = vpop.xlane.xlu0 %173
    %v175 = vsub.f32 %v170, %v174
    %v176 = vmul.f32 %v175, 1.442695
    %v177 = vpow.pop %v176
    %v178 = vsel %vm171, %v177, 0.0
    %179 = vadd.xlane.f32.xlu0 %v178
    %v180 = vpop.xlane.xlu0 %179
    %v181 = vlog2.pop %v180
    %v182 = vmul.f32 %v181, 0.6931472
    %v183 = vadd.f32 %v174, %v182
    %v184 = vsel %vm169, %v170, 0.0
    %v185 = vsel %vm171, %v184, 0.0
    %186 = vadd.xlane.f32.xlu0 %v185
    %v187 = vpop.xlane.xlu0 %186
    %v188 = vsub.f32 %v183, %v187
    %v189 = vsel %vm171, %v188, 0.0
    %v190 = vrot.slane %v189, 4
    %v191 = vadd.f32 %v189, %v190
    %v192 = vrot.slane %v191, 2
    %v193 = vadd.f32 %v191, %v192
    %v194 = vrot.slane %v193, 1
    %v195 = vadd.f32 %v193, %v194
    %vm196 = vcmask 0
    %197 = vst.msk [vmem:[#allocation5] sm:$0x1] %vm196, %v195
    %vm198 = vcmp.ge.f32.partialorder %v170, %v174
    %v199 = vsel %vm198, %v155, 10
    %v200 = vsel %vm171, %v199, 2147483647
    %v201 = vand.u32 %v200, 65535
    %v202 = vshra.s32 %v200, 16
    %v203 = vcvt.s32.f32 %v201
    %v204 = vcvt.s32.f32 %v202
    %205 = vmin.xlane.f32.xlu0 %v204
    %v206 = vpop.xlane.xlu0 %205
    %vm207 = vcmp.eq.f32.partialorder %v204, %v206
    %v208 = vsel %vm207, %v203, inf
    %209 = vmin.xlane.f32.xlu0 %v208
    %v210 = vpop.xlane.xlu0 %209
    %v211 = vcvt.f32.s32 %v210
    %v212 = vcvt.f32.s32 %v206
    %v213 = vshll.u32 %v212, 16
    %v214 = vadd.s32 %v213, %v211
    %vm215 = vcmask 1024
    %216 = vst.msk [vmem:[%s5] sm:$0x3] %vm215, %v214
    // Predicated region
    $region14: #{vit_model_forward.1} parent=1 // pred_check
      _
    $region15: #{vit_model_forward.1} parent=1 // pred_check_branch
      %218 = sbr.rel (0) target = $region17
    $region16: #{vit_model_forward.1} parent=1 // pred_region
      _
    $region17: #{vit_model_forward.1} parent=1 // pred_fallthru
      _
    // Predicated region
    $region18: #{vit_model_forward.1} parent=1 // pred_check
      _
    $region19: #{vit_model_forward.1} parent=1 // pred_check_branch
      %220 = sbr.rel (0) target = $region21
    $region20: #{vit_model_forward.1} parent=1 // pred_region
      %222 = vsyncadd [#allocation6], 0
      %s224 = sshll.u32 [#allocation5], 4
      %s225 = int_to_ptr.vmem [resolvable:$true] %s224
      %s226 = sshll.u32 %s6, 4
      %s227 = int_to_ptr.hbm [resolvable:$true] %s226
      %229 = dma.vmem_to_hbm [thread:$0]  %s225, 16, %s227, [#allocation6]
    $region21: #{vit_model_forward.1} parent=1 // pred_fallthru
      _
    // Predicated region
    $region22: #{vit_model_forward.1} parent=1 // pred_check
      _
    $region23: #{vit_model_forward.1} parent=1 // pred_check_branch
      %231 = sbr.rel (0) target = $region25
    $region24: #{vit_model_forward.1} parent=1 // pred_region
      _
    $region25: #{vit_model_forward.1} parent=1 // pred_fallthru
      _
    // Predicated region
    $region26: #{vit_model_forward.1} parent=1 // pred_check
      _
    $region27: #{vit_model_forward.1} parent=1 // pred_check_branch
      %233 = sbr.rel (0) target = $region29
    $region28: #{vit_model_forward.1} parent=1 // pred_region
      %235 = dma.done [#allocation6], 16
    $region29: #{vit_model_forward.1} parent=1 // pred_fallthru
      _
    %236 = vsyncpa [#allocation6], 1

</llo_original>
